<compile_context>
chip_gen: v5e
topology: v5e:2x2
jax: 0.10.0
libtpu: 0.0.40
codegen_flags: <defaults>
</compile_context>

<pallas_src>
import jax
import jax.numpy as jnp
from jax.experimental import pallas as pl
from jax.experimental.pallas import tpu as pltpu

HIDDEN = 64           # hidden width of both MLPs in the reference module
FUSED = 2 * HIDDEN    # 128: lane-dense fused width (actor half | critic half)


def _round_up(x, m):
    return (x + m - 1) // m * m


def _make_kernel(action_dim, compute_dtype=None):
    """Kernel closure over the (static) action_dim and optional MXU dtype."""

    def kernel(state_ref, w1_ref, w2_ref, bias_ref, out_ref):
        x = state_ref[...]                      # [bt, S] f32
        w1 = w1_ref[...]                        # [S, 128]
        w2 = w2_ref[...]                        # [128, 128] block-diagonal

        if compute_dtype is not None:           # v5e: bf16-native MXU
            x = x.astype(compute_dtype)
            w1 = w1.astype(compute_dtype)
            w2 = w2.astype(compute_dtype)

        b1 = bias_ref[0:1, :]                   # (1,128) fused layer-1 bias
        b2 = bias_ref[1:2, :]                   # (1,128) fused layer-2 bias
        w3 = bias_ref[2:3, :]                   # (1,128) masked critic w3
        b3 = bias_ref[3:4, :]                   # (1,128) critic b3 replicated

        # Fused layer 1 (actor | critic), both followed by ReLU.
        h = jnp.dot(x, w1, preferred_element_type=jnp.float32) + b1
        h = jnp.maximum(h, 0.0)                 # [bt, 128] f32
        if compute_dtype is not None:
            h = h.astype(compute_dtype)

        # Fused block-diagonal layer 2:
        #   lanes 0:action_dim    -> actor mean
        #   lanes HIDDEN:2*HIDDEN -> critic layer-2 pre-activation
        #   other lanes stay exactly 0 (W2/b2 are zero-padded).
        y2 = jnp.dot(h, w2, preferred_element_type=jnp.float32) + b2

        # Critic head: tanh, then the (64 -> 1) matmul as a VPU multiply +
        # XLU lane reduction.  w3 is zero on all non-critic lanes.
        t = jnp.tanh(y2)
        vsum = jnp.sum(t * w3, axis=-1, keepdims=True)        # [bt, 1]

        # Single lane-dense, unmasked 128-wide store.  Value is packed into
        # lane `action_dim`, adjacent to the mean, so the wrapper reads one
        # contiguous narrow slice.
        lane = jax.lax.broadcasted_iota(jnp.int32, y2.shape, 1)
        slab = jnp.where(lane < action_dim, y2, vsum + b3)
        out_ref[...] = slab.astype(out_ref.dtype)

    return kernel


def _choose_tiling(B, bt_max, row_align, num_cores=2):
    """Pick (#tiles, tile rows) bounding padding waste and keeping >=2 tiles
    (multiple of 2) for v7x megacore whenever the batch is large enough."""
    n = pl.cdiv(B, bt_max)
    if B >= row_align * num_cores:
        n = _round_up(max(n, num_cores), num_cores)
    bt = _round_up(pl.cdiv(B, n), row_align)
    return bt, n


def actor_critic_forward(state, fused, *, out_dtype=jnp.bfloat16,
                         compute_dtype=None, bt_max=4096):
    """state: [B, state_dim] f32.  fused: dict from fuse_params().

    out_dtype:     slab/HBM write dtype (bf16 halves the dominant HBM stream;
                   pass jnp.float32 for exact reference-precision outputs).
    compute_dtype: optional MXU operand dtype (jnp.bfloat16 recommended on v5e).
    """
    B, S = state.shape
    action_dim = int(fused["log_std"].shape[0])

    # Row alignment: 8 sublanes for 32-bit outputs, 16 for bf16 (packed vregs).
    row_align = 8 * (4 // jnp.dtype(out_dtype).itemsize)
    bt, n_tiles = _choose_tiling(B, bt_max, row_align)
    B_pad = bt * n_tiles
    if B_pad != B:
        state = jnp.pad(state, ((0, B_pad - B), (0, 0)))

    slab = pl.pallas_call(
        _make_kernel(action_dim, compute_dtype),
        out_shape=jax.ShapeDtypeStruct((B_pad, FUSED), out_dtype),
        grid=(n_tiles,),
        in_specs=[
            pl.BlockSpec((bt, S), lambda i: (i, 0)),          # state: tiled over batch
            pl.BlockSpec((S, FUSED), lambda i: (0, 0)),       # W1 resident
            pl.BlockSpec((FUSED, FUSED), lambda i: (0, 0)),   # W2 resident
            pl.BlockSpec((4, FUSED), lambda i: (0, 0)),       # [b1;b2;w3;b3] resident
        ],
        out_specs=pl.BlockSpec((bt, FUSED), lambda i: (i, 0)),
        compiler_params=pltpu.CompilerParams(
            dimension_semantics=("parallel",),
            vmem_limit_bytes=32 * 1024 * 1024,   # bt=4096 tiles also fit on v5e
        ),
    )(state, fused["W1"], fused["W2"], fused["bias"])

    # ONE contiguous narrow slice: [mean | value] in lanes 0 : action_dim+1.
    narrow = slab[:B, :action_dim + 1]
    mean = narrow[:, :action_dim]
    value = narrow[:, action_dim:action_dim + 1]
    std = jnp.exp(fused["log_std"])              # batch-independent; plain JAX
    return mean, std, value


def init_params(key, state_dim, action_dim, hidden=HIDDEN):
    """Per-layer params mimicking torch.nn.Linear init. Weights stored (in, out)."""
    ks = jax.random.split(key, 10)

    def lin(kw, kb, fan_in, fan_out):
        bound = 1.0 / jnp.sqrt(fan_in)
        w = jax.random.uniform(kw, (fan_in, fan_out), jnp.float32, -bound, bound)
        b = jax.random.uniform(kb, (1, fan_out), jnp.float32, -bound, bound)
        return w, b

    aw1, ab1 = lin(ks[0], ks[1], state_dim, hidden)
    aw2, ab2 = lin(ks[2], ks[3], hidden, action_dim)
    cw1, cb1 = lin(ks[4], ks[5], state_dim, hidden)
    cw2, cb2 = lin(ks[6], ks[7], hidden, hidden)
    cw3, cb3 = lin(ks[8], ks[9], hidden, 1)
    log_std = jnp.zeros((action_dim,), jnp.float32)

    return dict(aw1=aw1, ab1=ab1, aw2=aw2, ab2=ab2, log_std=log_std,
                cw1=cw1, cb1=cb1, cw2=cw2, cb2=cb2, cw3=cw3, cb3=cb3)


def fuse_params(p):
    """Build the fused / block-diagonal parameter layout consumed by the kernel."""
    action_dim = p["aw2"].shape[1]
    assert action_dim <= HIDDEN, "action_dim must fit in the actor lane half"

    # Layer 1: concat along output axis -> (S, 128).
    W1 = jnp.concatenate([p["aw1"], p["cw1"]], axis=1)

    # Layer 2: block-diagonal (128, 128), zero-padded so unused lanes stay 0.
    W2 = jnp.zeros((FUSED, FUSED), jnp.float32)
    W2 = W2.at[:HIDDEN, :action_dim].set(p["aw2"])
    W2 = W2.at[HIDDEN:, HIDDEN:].set(p["cw2"])

    # Fused bias/head slab (4, 128): rows = b1 | b2 | masked w3 | replicated b3.
    b1 = jnp.concatenate([p["ab1"], p["cb1"]], axis=1)
    b2 = jnp.zeros((1, FUSED), jnp.float32)
    b2 = b2.at[:, :action_dim].set(p["ab2"])
    b2 = b2.at[:, HIDDEN:].set(p["cb2"])
    w3 = jnp.zeros((1, FUSED), jnp.float32).at[:, HIDDEN:].set(p["cw3"][:, 0])
    b3 = jnp.full((1, FUSED), p["cb3"][0, 0], jnp.float32)
    bias = jnp.concatenate([b1, b2, w3, b3], axis=0)

    return dict(W1=W1, W2=W2, bias=bias, log_std=p["log_std"])


def reference_forward(state, p):
    h = jnp.maximum(state @ p["aw1"] + p["ab1"], 0.0)
    mean = h @ p["aw2"] + p["ab2"]
    std = jnp.exp(p["log_std"])
    c = jnp.maximum(state @ p["cw1"] + p["cb1"], 0.0)
    c = jnp.tanh(c @ p["cw2"] + p["cb2"])
    value = c @ p["cw3"] + p["cb3"]
    return mean, std, value


if __name__ == "__main__":
    key = jax.random.PRNGKey(0)
    k_state, k_params = jax.random.split(key)

    B, state_dim, action_dim = 8, 16, 4
    state = jax.random.normal(k_state, (B, state_dim), jnp.float32)
    params = init_params(k_params, state_dim, action_dim)
    fused = fuse_params(params)

    rm, rs, rv = reference_forward(state, params)

    # 1) Exact-precision path (f32 slab) -- matches the PyTorch module tightly.
    mean, std, value = jax.block_until_ready(
        actor_critic_forward(state, fused, out_dtype=jnp.float32))
    assert mean.shape == (B, action_dim) and std.shape == (action_dim,) and value.shape == (B, 1)
    assert jnp.allclose(mean, rm, atol=1e-5), "mean mismatch (f32)"
    assert jnp.allclose(std, rs, atol=1e-6), "std mismatch"
    assert jnp.allclose(value, rv, atol=1e-5), "value mismatch (f32)"

    # 2) Default fast path: bf16 slab writeback (halves the dominant HBM stream).
    mean_bf, std_bf, value_bf = jax.block_until_ready(actor_critic_forward(state, fused))
    assert mean_bf.shape == (B, action_dim) and value_bf.shape == (B, 1)
    assert jnp.allclose(mean_bf.astype(jnp.float32), rm, atol=2e-2, rtol=2e-2), "mean mismatch (bf16)"
    assert jnp.allclose(value_bf.astype(jnp.float32), rv, atol=2e-2, rtol=2e-2), "value mismatch (bf16)"

    print("KERNEL_OK")
</pallas_src>

<mosaic_0001>
module attributes {stable_mosaic.version = 11 : i64} {
  func.func @kernel(%arg0: i32, %arg1: memref<8x16xf32, #tpu.memory_space<vmem>>, %arg2: memref<16x128xf32, #tpu.memory_space<vmem>>, %arg3: memref<128x128xf32, #tpu.memory_space<vmem>>, %arg4: memref<4x128xf32, #tpu.memory_space<vmem>>, %arg5: memref<8x128xf32, #tpu.memory_space<vmem>>) attributes {dimension_semantics = [#tpu.dimension_semantics<parallel>], iteration_bounds = array<i64: 1>, scalar_prefetch = 0 : i64, scratch_operands = 0 : i64, tpu.core_type = #tpu.core_type<tc>, window_params = [{transform_indices = @transform_0, window_bounds = array<i64: 8, 16>}, {pipeline_mode = #tpu.pipeline_mode<synchronous>, transform_indices = @transform_1, window_bounds = array<i64: 16, 128>}, {pipeline_mode = #tpu.pipeline_mode<synchronous>, transform_indices = @transform_2, window_bounds = array<i64: 128, 128>}, {pipeline_mode = #tpu.pipeline_mode<synchronous>, transform_indices = @transform_3, window_bounds = array<i64: 4, 128>}, {transform_indices = @transform_4, window_bounds = array<i64: 8, 128>}]} {
    %c0 = arith.constant 0 : index
    %c0_0 = arith.constant 0 : index
    %0 = vector.load %arg1[%c0, %c0_0] : memref<8x16xf32, #tpu.memory_space<vmem>>, vector<8x16xf32>
    %c0_1 = arith.constant 0 : index
    %c0_2 = arith.constant 0 : index
    %1 = vector.load %arg2[%c0_1, %c0_2] : memref<16x128xf32, #tpu.memory_space<vmem>>, vector<16x128xf32>
    %c0_3 = arith.constant 0 : index
    %c0_4 = arith.constant 0 : index
    %2 = vector.load %arg3[%c0_3, %c0_4] : memref<128x128xf32, #tpu.memory_space<vmem>>, vector<128x128xf32>
    %c0_5 = arith.constant 0 : index
    %c0_6 = arith.constant 0 : index
    %3 = vector.load %arg4[%c0_5, %c0_6] : memref<4x128xf32, #tpu.memory_space<vmem>>, vector<1x128xf32>
    %c1 = arith.constant 1 : index
    %c0_7 = arith.constant 0 : index
    %4 = vector.load %arg4[%c1, %c0_7] : memref<4x128xf32, #tpu.memory_space<vmem>>, vector<1x128xf32>
    %c2 = arith.constant 2 : index
    %c0_8 = arith.constant 0 : index
    %5 = vector.load %arg4[%c2, %c0_8] : memref<4x128xf32, #tpu.memory_space<vmem>>, vector<1x128xf32>
    %c3 = arith.constant 3 : index
    %c0_9 = arith.constant 0 : index
    %6 = vector.load %arg4[%c3, %c0_9] : memref<4x128xf32, #tpu.memory_space<vmem>>, vector<1x128xf32>
    %cst = arith.constant dense<0.000000e+00> : vector<8x128xf32>
    %7 = tpu.matmul %0, %1, %cst {dimension_numbers = #tpu.dot_dimension_numbers<[1], [0], [0], [1], [0, 0, 1, 1], [], []>} : vector<8x16xf32>, vector<16x128xf32>, vector<8x128xf32> -> vector<8x128xf32>
    %8 = vector.broadcast %3 : vector<1x128xf32> to vector<8x128xf32>
    %9 = arith.addf %7, %8 : vector<8x128xf32>
    %cst_10 = arith.constant 0.000000e+00 : f32
    %10 = vector.broadcast %cst_10 : f32 to vector<8x128xf32>
    %11 = arith.maximumf %9, %10 : vector<8x128xf32>
    %cst_11 = arith.constant dense<0.000000e+00> : vector<8x128xf32>
    %12 = tpu.matmul %11, %2, %cst_11 {dimension_numbers = #tpu.dot_dimension_numbers<[1], [0], [0], [1], [0, 0, 1, 1], [], []>} : vector<8x128xf32>, vector<128x128xf32>, vector<8x128xf32> -> vector<8x128xf32>
    %13 = vector.broadcast %4 : vector<1x128xf32> to vector<8x128xf32>
    %14 = arith.addf %12, %13 : vector<8x128xf32>
    %15 = math.tanh %14 : vector<8x128xf32>
    %16 = vector.broadcast %5 : vector<1x128xf32> to vector<8x128xf32>
    %17 = arith.mulf %15, %16 : vector<8x128xf32>
    %cst_12 = arith.constant dense<0.000000e+00> : vector<8xf32>
    %18 = vector.multi_reduction <add>, %17, %cst_12 [1] : vector<8x128xf32> to vector<8xf32>
    %19 = vector.shape_cast %18 : vector<8xf32> to vector<8x1xf32>
    %20 = tpu.iota {dimensions = array<i32: 1>} : vector<8x128xi32>
    %c4_i32 = arith.constant 4 : i32
    %21 = vector.broadcast %c4_i32 : i32 to vector<8x128xi32>
    %22 = arith.cmpi slt, %20, %21 : vector<8x128xi32>
    %23 = vector.broadcast %19 : vector<8x1xf32> to vector<8x128xf32>
    %24 = vector.broadcast %6 : vector<1x128xf32> to vector<8x128xf32>
    %25 = arith.addf %23, %24 : vector<8x128xf32>
    %26 = arith.select %22, %14, %25 : vector<8x128xi1>, vector<8x128xf32>
    %c0_13 = arith.constant 0 : index
    %c0_14 = arith.constant 0 : index
    %27 = vector.load %arg5[%c0_13, %c0_14] : memref<8x128xf32, #tpu.memory_space<vmem>>, vector<8x128xf32>
    tpu.vector_store %arg5[%c0_13, %c0_14], %26 {strides = array<i32>} : memref<8x128xf32, #tpu.memory_space<vmem>>, vector<8x128xf32>,
    return
  }
  func.func @transform_0(%arg0: i32) -> (i32, i32) {
    %c0_i32 = arith.constant 0 : i32
    %c0_i32_0 = arith.constant 0 : i32
    return %arg0, %c0_i32 : i32, i32
  }
  func.func @transform_1(%arg0: i32) -> (i32, i32) {
    %c0_i32 = arith.constant 0 : i32
    %c0_i32_0 = arith.constant 0 : i32
    %c0_i32_1 = arith.constant 0 : i32
    return %c0_i32, %c0_i32_0 : i32, i32
  }
  func.func @transform_2(%arg0: i32) -> (i32, i32) {
    %c0_i32 = arith.constant 0 : i32
    %c0_i32_0 = arith.constant 0 : i32
    %c0_i32_1 = arith.constant 0 : i32
    return %c0_i32, %c0_i32_0 : i32, i32
  }
  func.func @transform_3(%arg0: i32) -> (i32, i32) {
    %c0_i32 = arith.constant 0 : i32
    %c0_i32_0 = arith.constant 0 : i32
    %c0_i32_1 = arith.constant 0 : i32
    return %c0_i32, %c0_i32_0 : i32, i32
  }
  func.func @transform_4(%arg0: i32) -> (i32, i32) {
    %c0_i32 = arith.constant 0 : i32
    %c0_i32_0 = arith.constant 0 : i32
    return %arg0, %c0_i32 : i32, i32
  }
}

</mosaic_0001>

<llo_original>
// kernel: tpu_custom_call.1
$region0: #{tpu_custom_call.1}
  #allocation0 [shape = 'u32[]', space=smem, size = 0x4, offset = 0x4, fixed_abs, tag = 'smem constant byte address 0x4 - core index']
  #allocation1 [shape = 'u32[72,128]{1,0:T(1,128)}', space=vmem, size = 0x9000, scoped, tag = 'internal scratch']
  %s0 = inlined_call_operand.hbm [shape: f32[8,16], index: 0, kind: input, shape index: {}]
  %s1 = inlined_call_operand.hbm [shape: f32[16,128], index: 1, kind: input, shape index: {}]
  %s2 = inlined_call_operand.hbm [shape: f32[128,128], index: 2, kind: input, shape index: {}]
  %s3 = inlined_call_operand.hbm [shape: f32[4,128], index: 3, kind: input, shape index: {}]
  %s4 = inlined_call_operand.hbm [shape: f32[8,128], index: 4, kind: output, shape index: {}]
  %s5 = sld [smem:[#allocation0]]
  $region42: #{tpu_custom_call.1} parent=0
    _
  %s7 = ssub.s32 1, %s5
  %s8 = scalar_select 0, %s7, %s5
  $region1: #{tpu_custom_call.1} parent=0
    #allocation2 [shape = 'u8[4096]{0}', space=vmem, size = 0x1000, scoped, tag = 'input window, operand 0, single buffered']
    #allocation3 [shape = 's32[1]{0}', space=sflag, size = 0x4, scoped, tag = 'scoped memory for tpu_custom_call.1']
    #allocation4 [shape = 's32[1]{0}', space=sflag, size = 0x4, scoped, tag = 'scoped memory for tpu_custom_call.1']
    #allocation5 [shape = 'u8[8192]{0}', space=vmem, size = 0x2000, scoped, tag = 'input window, operand 1, single buffered']
    #allocation6 [shape = 's32[1]{0}', space=sflag, size = 0x4, scoped, tag = 'scoped memory for tpu_custom_call.1']
    #allocation7 [shape = 'u8[65536]{0}', space=vmem, size = 0x10000, scoped, tag = 'input window, operand 2, single buffered']
    #allocation8 [shape = 'u8[2048]{0}', space=vmem, size = 0x800, scoped, tag = 'input window, operand 3, single buffered']
    #allocation9 [shape = 's32[1]{0}', space=sflag, size = 0x4, scoped, tag = 'scoped memory for tpu_custom_call.1']
    #allocation10 [shape = 'u8[4096]{0}', space=vmem, size = 0x1000, scoped, tag = 'output window, operand 0, single buffered']
    %9 = vsyncpa [#allocation3], 0
    %10 = vsyncpa [#allocation6], 0
    %11 = vsyncpa [#allocation9], 0
    %12 = vsyncpa [#allocation4], 0
    // Predicated region
    $region2: #{tpu_custom_call.1} parent=1 // pred_check
      _
    $region3: #{tpu_custom_call.1} parent=1 // pred_check_branch
      %14 = sbr.rel (0) target = $region5
    $region4: #{tpu_custom_call.1} parent=1 // pred_region
      %16 = vsyncadd [#allocation3], 0
      %s18 = sshll.u32 %s0, 4
      %s19 = int_to_ptr.hbm [resolvable:$true] %s18
      %s20 = sshll.u32 [#allocation2], 4
      %s21 = int_to_ptr.vmem [resolvable:$true] %s20
      %23 = dma.hbm_to_vmem [thread:$0]  %s19, 128, %s21, [#allocation3]
    $region5: #{tpu_custom_call.1} parent=1 // pred_fallthru
      _
    // Predicated region
    $region6: #{tpu_custom_call.1} parent=1 // pred_check
      _
    $region7: #{tpu_custom_call.1} parent=1 // pred_check_branch
      %25 = sbr.rel (0) target = $region9
    $region8: #{tpu_custom_call.1} parent=1 // pred_region
      %27 = vsyncadd [#allocation6], 0
      %s28 = sshll.u32 %s1, 4
      %s29 = int_to_ptr.hbm [resolvable:$true] %s28
      %s30 = sshll.u32 [#allocation5], 4
      %s31 = int_to_ptr.vmem [resolvable:$true] %s30
      %36 = dma.hbm_to_vmem [thread:$0]  %s29, 256, %s31, [#allocation6], 128, 128, 8
    $region9: #{tpu_custom_call.1} parent=1 // pred_fallthru
      _
    // Predicated region
    $region10: #{tpu_custom_call.1} parent=1 // pred_check
      _
    $region11: #{tpu_custom_call.1} parent=1 // pred_check_branch
      %38 = sbr.rel (0) target = $region13
    $region12: #{tpu_custom_call.1} parent=1 // pred_region
      %40 = vsyncadd [#allocation6], 0
      %s41 = sshll.u32 %s2, 4
      %s42 = int_to_ptr.hbm [resolvable:$true] %s41
      %s43 = sshll.u32 [#allocation7], 4
      %s44 = int_to_ptr.vmem [resolvable:$true] %s43
      %49 = dma.hbm_to_vmem [thread:$0]  %s42, 2048, %s44, [#allocation6], 128, 128, 8
    $region13: #{tpu_custom_call.1} parent=1 // pred_fallthru
      _
    // Predicated region
    $region14: #{tpu_custom_call.1} parent=1 // pred_check
      _
    $region15: #{tpu_custom_call.1} parent=1 // pred_check_branch
      %51 = sbr.rel (0) target = $region17
    $region16: #{tpu_custom_call.1} parent=1 // pred_region
      %53 = vsyncadd [#allocation9], 0
      %s55 = sshll.u32 %s3, 4
      %s56 = int_to_ptr.hbm [resolvable:$true] %s55
      %s57 = sshll.u32 [#allocation8], 4
      %s58 = int_to_ptr.vmem [resolvable:$true] %s57
      %60 = dma.hbm_to_vmem [thread:$0]  %s56, 64, %s58, [#allocation9]
    $region17: #{tpu_custom_call.1} parent=1 // pred_fallthru
      _
    // Predicated region
    $region18: #{tpu_custom_call.1} parent=1 // pred_check
      _
    $region19: #{tpu_custom_call.1} parent=1 // pred_check_branch
      %62 = sbr.rel (0) target = $region21
    $region20: #{tpu_custom_call.1} parent=1 // pred_region
      %64 = dma.done [#allocation3], 128
    $region21: #{tpu_custom_call.1} parent=1 // pred_fallthru
      _
    // Predicated region
    $region22: #{tpu_custom_call.1} parent=1 // pred_check
      _
    $region23: #{tpu_custom_call.1} parent=1 // pred_check_branch
      %66 = sbr.rel (0) target = $region25
    $region24: #{tpu_custom_call.1} parent=1 // pred_region
      %68 = dma.done [#allocation6], 256
    $region25: #{tpu_custom_call.1} parent=1 // pred_fallthru
      _
    // Predicated region
    $region26: #{tpu_custom_call.1} parent=1 // pred_check
      _
    $region27: #{tpu_custom_call.1} parent=1 // pred_check_branch
      %70 = sbr.rel (0) target = $region29
    $region28: #{tpu_custom_call.1} parent=1 // pred_region
      %72 = dma.done [#allocation6], 2048
    $region29: #{tpu_custom_call.1} parent=1 // pred_fallthru
      _
    // Predicated region
    $region30: #{tpu_custom_call.1} parent=1 // pred_check
      _
    $region31: #{tpu_custom_call.1} parent=1 // pred_check_branch
      %74 = sbr.rel (0) target = $region33
    $region32: #{tpu_custom_call.1} parent=1 // pred_region
      %76 = dma.done [#allocation9], 64
    $region33: #{tpu_custom_call.1} parent=1 // pred_fallthru
      _
    %v77 = vld [vmem:[#allocation2] sm:$0xff]
    %v78 = vld [vmem:[#allocation5] sm:$0xff]
    %v79 = vld [vmem:[#allocation5 + $0x8] sm:$0xff]
    %v80 = vld [vmem:[#allocation7] sm:$0xff]
    %v81 = vld [vmem:[#allocation7 + $0x8] sm:$0xff]
    %v82 = vld [vmem:[#allocation7 + $0x10] sm:$0xff]
    %v83 = vld [vmem:[#allocation7 + $0x18] sm:$0xff]
    %v84 = vld [vmem:[#allocation7 + $0x20] sm:$0xff]
    %v85 = vld [vmem:[#allocation7 + $0x28] sm:$0xff]
    %v86 = vld [vmem:[#allocation7 + $0x30] sm:$0xff]
    %v87 = vld [vmem:[#allocation7 + $0x38] sm:$0xff]
    %v88 = vld [vmem:[#allocation7 + $0x40] sm:$0xff]
    %v89 = vld [vmem:[#allocation7 + $0x48] sm:$0xff]
    %v90 = vld [vmem:[#allocation7 + $0x50] sm:$0xff]
    %v91 = vld [vmem:[#allocation7 + $0x58] sm:$0xff]
    %v92 = vld [vmem:[#allocation7 + $0x60] sm:$0xff]
    %v93 = vld [vmem:[#allocation7 + $0x68] sm:$0xff]
    %v94 = vld [vmem:[#allocation7 + $0x70] sm:$0xff]
    %v95 = vld [vmem:[#allocation7 + $0x78] sm:$0xff]
    %v96 = vld [vmem:[#allocation8] sm:$0x1]
    %v97 = vld [vmem:[#allocation8 + $0x1] sm:$0x1]
    %v98 = vld [vmem:[#allocation8 + $0x2] sm:$0x1]
    %v99 = vld [vmem:[#allocation8 + $0x3] sm:$0x1]
    %v100 = vperm.slane %v96, 0
    %vm101 = vcmask 130048
    %v103 = vsel %vm101, %v77, 0
    %105 = vmatpush.msra.mxu0 0.0
    %106 = vmatpush.msra.mxu0 0.0
    %107 = vmatpush.msra.mxu0 0.0
    %108 = vmatpush.msra.mxu0 0.0
    %109 = vmatpush.msra.mxu0 0.0
    %110 = vmatpush.msra.mxu0 0.0
    %111 = vmatpush.msra.mxu0 0.0
    %112 = vmatpush.msra.mxu0 0.0
    %113 = vmatpush.msra.mxu0 0.0
    %114 = vmatpush.msra.mxu0 0.0
    %115 = vmatpush.msra.mxu0 0.0
    %116 = vmatpush.msra.mxu0 0.0
    %117 = vmatpush.msra.mxu0 0.0
    %118 = vmatpush.msra.mxu0 0.0
    %119 = vmatpush.msra.mxu0 %v79
    %120 = vmatpush.msra.mxu0 %v78
    %121 = vmatmul.f32.gmra.mxu0 %v103
    %v122 = vpop.f32.mrf.mxu0
    %v123 = vadd.f32 %v100, %v122
    %124 = vdwg.mxu0
    %v125 = vmax.f32 %v123, 0.0
    %v126 = vperm.slane %v97, 0
    %127 = vmatpush.msra.mxu0 %v95
    %128 = vmatpush.msra.mxu0 %v94
    %129 = vmatpush.msra.mxu0 %v93
    %130 = vmatpush.msra.mxu0 %v92
    %131 = vmatpush.msra.mxu0 %v91
    %132 = vmatpush.msra.mxu0 %v90
    %133 = vmatpush.msra.mxu0 %v89
    %134 = vmatpush.msra.mxu0 %v88
    %135 = vmatpush.msra.mxu0 %v87
    %136 = vmatpush.msra.mxu0 %v86
    %137 = vmatpush.msra.mxu0 %v85
    %138 = vmatpush.msra.mxu0 %v84
    %139 = vmatpush.msra.mxu0 %v83
    %140 = vmatpush.msra.mxu0 %v82
    %141 = vmatpush.msra.mxu0 %v81
    %142 = vmatpush.msra.mxu0 %v80
    %143 = vmatmul.f32.gmra.mxu0 %v125
    %v144 = vpop.f32.mrf.mxu0
    %v145 = vadd.f32 %v126, %v144
    %146 = vdwg.mxu0
    %v147 = vtanh.pop %v145
    %v148 = vperm.slane %v98, 0
    %v149 = vmul.f32 %v147, %v148
    %150 = vadd.xlane.f32.xlu0 %v149
    %v151 = vpop.xlane.xlu0 %150
    %v152 = vlaneseq
    %v153 = vand.u32 %v152, 127
    %vm154 = vcmp.lt.s32.totalorder %v153, 4
    %v155 = vperm.slane %v99, 0
    %v156 = vadd.f32 %v151, %v155
    %v157 = vsel %vm154, %v145, %v156
    %158 = vst [vmem:[#allocation10] sm:$0xff] %v157
    // Predicated region
    $region34: #{tpu_custom_call.1} parent=1 // pred_check
      _
    $region35: #{tpu_custom_call.1} parent=1 // pred_check_branch
      %160 = sbr.rel (0) target = $region37
    $region36: #{tpu_custom_call.1} parent=1 // pred_region
      %162 = vsyncadd [#allocation4], 0
      %s164 = sshll.u32 [#allocation10], 4
      %s165 = int_to_ptr.vmem [resolvable:$true] %s164
      %s166 = sshll.u32 %s4, 4
      %s167 = int_to_ptr.hbm [resolvable:$true] %s166
      %169 = dma.vmem_to_hbm [thread:$0]  %s165, 128, %s167, [#allocation4]
    $region37: #{tpu_custom_call.1} parent=1 // pred_fallthru
      _
    // Predicated region
    $region38: #{tpu_custom_call.1} parent=1 // pred_check
      _
    $region39: #{tpu_custom_call.1} parent=1 // pred_check_branch
      %171 = sbr.rel (0) target = $region41
    $region40: #{tpu_custom_call.1} parent=1 // pred_region
      %173 = dma.done [#allocation4], 128
    $region41: #{tpu_custom_call.1} parent=1 // pred_fallthru
      _
    %174 = vsyncpa [#allocation3], 1
    %175 = vsyncpa [#allocation6], 1
    %176 = vsyncpa [#allocation9], 1
    %177 = vsyncpa [#allocation4], 1

</llo_original>
